<compile_context>
chip_gen: v5e
topology: v5e:2x2
jax: 0.10.0
libtpu: 0.0.40
codegen_flags: <defaults>
</compile_context>

<pallas_src>
import functools

import jax
import jax.numpy as jnp
from jax.experimental import pallas as pl
from jax.experimental.pallas import tpu as pltpu


_SUBLANE = 8
_LANE = 128
_FUSED_BUDGET_BYTES = 2 << 20      # per pipelined buffer, fused single-pass path
_TWO_PASS_BUDGET_BYTES = 1 << 20   # per pipelined buffer, two-pass path
_MAX_TILE_L = 32768                # lane-axis tile cap (multiple of 128)


# ---------------------------------------------------------------------------
# Kernels
# ---------------------------------------------------------------------------

def _bn_fused_kernel(x_ref, o_ref, *, m_total):
    """Single-pass batch norm for one channel tile.  x_ref/o_ref: (N, TC, L)."""
    x = x_ref[...].astype(jnp.float32)
    inv_m = 1.0 / float(m_total)
    s = jnp.sum(x, axis=(0, 2), keepdims=True)           # (1, TC, 1)
    sq = jnp.sum(x * x, axis=(0, 2), keepdims=True)      # (1, TC, 1)
    mean = s * inv_m
    var = jnp.maximum(sq * inv_m - mean * mean, 0.0)     # guard fp32 cancellation
    rstd = jax.lax.rsqrt(var)                            # eps = 0 (as in module)
    o_ref[...] = ((x - mean) * rstd).astype(o_ref.dtype)


def _bn_stats_kernel(x_ref, mean_ref, rstd_ref, *, m_total, l_total, block_l,
                     mask_l):
    """Pass 1: accumulate per-channel sum / sumsq, finalize mean and 1/std.

    x_ref: (TC, TL) (batch dim squeezed).  mean_ref / rstd_ref: (TC, 1) f32,
    resident across the (N, L-tile) reduction grid axes (accumulator pattern).
    """
    ni = pl.program_id(1)
    li = pl.program_id(2)

    @pl.when(jnp.logical_and(ni == 0, li == 0))
    def _init():
        mean_ref[...] = jnp.zeros_like(mean_ref)
        rstd_ref[...] = jnp.zeros_like(rstd_ref)

    x = x_ref[...].astype(jnp.float32)                   # (TC, TL)
    if mask_l:
        # Mask padded lanes of the last (partial) L tile out of the statistics.
        lane = jax.lax.broadcasted_iota(jnp.int32, x.shape, 1)
        valid = (lane + li * block_l) < l_total
        x = jnp.where(valid, x, 0.0)

    mean_ref[...] += jnp.sum(x, axis=-1, keepdims=True)        # running sum
    rstd_ref[...] += jnp.sum(x * x, axis=-1, keepdims=True)    # running sumsq

    @pl.when(jnp.logical_and(ni == pl.num_programs(1) - 1,
                             li == pl.num_programs(2) - 1))
    def _finalize():
        inv_m = 1.0 / float(m_total)
        mean = mean_ref[...] * inv_m
        var = jnp.maximum(rstd_ref[...] * inv_m - mean * mean, 0.0)
        mean_ref[...] = mean
        rstd_ref[...] = jax.lax.rsqrt(var)               # eps = 0 (as in module)


def _bn_normalize_kernel(x_ref, mean_ref, rstd_ref, o_ref):
    """Pass 2: normalize one (TC, TL) tile with finalized per-channel stats."""
    x = x_ref[...].astype(jnp.float32)                   # (TC, TL)
    o_ref[...] = ((x - mean_ref[...]) * rstd_ref[...]).astype(o_ref.dtype)


# ---------------------------------------------------------------------------
# Tile selection
# ---------------------------------------------------------------------------

def _fused_channel_tile(n, c, l, itemsize):
    """Channel tile for the fused path, or 0 if a full (N, tc, L) slab is too big."""
    per_channel = n * l * itemsize
    if per_channel > _FUSED_BUDGET_BYTES:
        return 0
    max_tc = _FUSED_BUDGET_BYTES // per_channel
    if c <= max_tc:
        return c                                  # full C (allowed even if not %8)
    if max_tc < _SUBLANE:
        return 0
    return int(max_tc // _SUBLANE) * _SUBLANE     # multiple of 8


def _two_pass_tiles(c, l, itemsize, tile_l):
    if tile_l is not None:
        if not (tile_l == l or (tile_l % _LANE == 0 and tile_l <= l)):
            raise ValueError("tile_l must equal L or be a multiple of 128 and <= L")
        tl = tile_l
    else:
        tl = l if l <= _MAX_TILE_L else _MAX_TILE_L
    if c <= _SUBLANE:
        tc = c
    else:
        fit = max(_SUBLANE,
                  (_TWO_PASS_BUDGET_BYTES // (tl * itemsize)) // _SUBLANE * _SUBLANE)
        tc = min(fit, (c // _SUBLANE) * _SUBLANE)
    return tc, tl


# ---------------------------------------------------------------------------
# Forward wrappers
# ---------------------------------------------------------------------------

def _forward_fused(x, tc):
    n, c, l = x.shape
    nc = pl.cdiv(c, tc)
    kernel = functools.partial(_bn_fused_kernel, m_total=n * l)
    return pl.pallas_call(
        kernel,
        out_shape=jax.ShapeDtypeStruct((n, c, l), x.dtype),
        grid_spec=pltpu.PrefetchScalarGridSpec(
            num_scalar_prefetch=0,
            grid=(nc,),
            in_specs=[pl.BlockSpec((n, tc, l), lambda ci: (0, ci, 0))],
            out_specs=pl.BlockSpec((n, tc, l), lambda ci: (0, ci, 0)),
        ),
        compiler_params=pltpu.CompilerParams(
            dimension_semantics=("parallel",)),
    )(x)


def _forward_two_pass(x, tile_l=None):
    n, c, l = x.shape
    itemsize = jnp.dtype(x.dtype).itemsize
    tc, tl = _two_pass_tiles(c, l, itemsize, tile_l)
    nc = pl.cdiv(c, tc)
    nl = pl.cdiv(l, tl)
    mask_l = (l % tl) != 0

    x_spec = pl.BlockSpec((None, tc, tl), lambda ci, ni, li: (ni, ci, li))
    stat_spec = pl.BlockSpec((tc, 1), lambda ci, ni, li: (ci, 0))

    stats_kernel = functools.partial(
        _bn_stats_kernel, m_total=n * l, l_total=l, block_l=tl, mask_l=mask_l)

    mean, rstd = pl.pallas_call(
        stats_kernel,
        out_shape=(jax.ShapeDtypeStruct((c, 1), jnp.float32),
                   jax.ShapeDtypeStruct((c, 1), jnp.float32)),
        grid_spec=pltpu.PrefetchScalarGridSpec(
            num_scalar_prefetch=0,
            grid=(nc, n, nl),
            in_specs=[x_spec],
            out_specs=(stat_spec, stat_spec),
        ),
        compiler_params=pltpu.CompilerParams(
            dimension_semantics=("parallel", "arbitrary", "arbitrary")),
    )(x)

    out = pl.pallas_call(
        _bn_normalize_kernel,
        out_shape=jax.ShapeDtypeStruct((n, c, l), x.dtype),
        grid_spec=pltpu.PrefetchScalarGridSpec(
            num_scalar_prefetch=0,
            grid=(nc, n, nl),
            in_specs=[x_spec, stat_spec, stat_spec],
            out_specs=x_spec,
        ),
        compiler_params=pltpu.CompilerParams(
            dimension_semantics=("parallel", "parallel", "parallel")),
    )(x, mean, rstd)
    return out


def shared_mlp1d_forward(x, *, force_two_pass=False, tile_l=None):
    """SharedMLP1D forward: BatchNorm1d(eps=0, momentum=0, affine=False), training stats.

    x: (N, C, L).  Returns (N, C, L) in x.dtype; statistics computed in float32.
    """
    n, c, l = x.shape
    itemsize = jnp.dtype(x.dtype).itemsize
    if not force_two_pass and tile_l is None:
        tc = _fused_channel_tile(n, c, l, itemsize)
        if tc > 0:
            return _forward_fused(x, tc)
    return _forward_two_pass(x, tile_l=tile_l)


# ---------------------------------------------------------------------------
# Self-test
# ---------------------------------------------------------------------------

def _reference(x):
    xf = x.astype(jnp.float32)
    mean = jnp.mean(xf, axis=(0, 2), keepdims=True)
    var = jnp.mean((xf - mean) ** 2, axis=(0, 2), keepdims=True)
    return ((xf - mean) / jnp.sqrt(var)).astype(x.dtype)


if __name__ == "__main__":
    key = jax.random.PRNGKey(0)

    # Small canonical shape -> fused single-pass path.
    N, C, L = 2, 4, 16
    x = 2.0 * jax.random.normal(key, (N, C, L), dtype=jnp.float32) + 1.5

    out = jax.block_until_ready(shared_mlp1d_forward(x))
    ref = _reference(x)
    assert jnp.allclose(out, ref, atol=1e-5, rtol=1e-5), "fused path mismatch"

    # Same input through the two-pass (stats + normalize) path.
    out2 = jax.block_until_ready(shared_mlp1d_forward(x, force_two_pass=True))
    assert jnp.allclose(out2, ref, atol=1e-5, rtol=1e-5), "two-pass path mismatch"

    # Two-pass path with ragged tiles: C not a multiple of the channel tile and
    # L not a multiple of the (forced) lane tile -> exercises the lane mask and
    # out-of-bounds-write-discard handling.
    key2 = jax.random.PRNGKey(1)
    x3 = 3.0 * jax.random.normal(key2, (3, 12, 200), dtype=jnp.float32) - 0.7
    out3 = jax.block_until_ready(
        shared_mlp1d_forward(x3, force_two_pass=True, tile_l=128))
    ref3 = _reference(x3)
    assert jnp.allclose(out3, ref3, atol=1e-5, rtol=1e-5), "masked tile mismatch"

    print("KERNEL_OK")
</pallas_src>

<mosaic_0001>
module attributes {stable_mosaic.version = 11 : i64} {
  func.func @_bn_fused_kernel(%arg0: i32, %arg1: memref<2x4x16xf32, #tpu.memory_space<vmem>>, %arg2: memref<2x4x16xf32, #tpu.memory_space<vmem>>) attributes {dimension_semantics = [#tpu.dimension_semantics<parallel>], iteration_bounds = array<i64: 1>, scalar_prefetch = 0 : i64, scratch_operands = 0 : i64, tpu.core_type = #tpu.core_type<tc>, window_params = [{transform_indices = @transform_0, window_bounds = array<i64: 2, 4, 16>}, {transform_indices = @transform_1, window_bounds = array<i64: 2, 4, 16>}]} {
    %c0 = arith.constant 0 : index
    %c0_0 = arith.constant 0 : index
    %c0_1 = arith.constant 0 : index
    %0 = vector.load %arg1[%c0, %c0_0, %c0_1] : memref<2x4x16xf32, #tpu.memory_space<vmem>>, vector<2x4x16xf32>
    %cst = arith.constant dense<0.000000e+00> : vector<4xf32>
    %1 = vector.multi_reduction <add>, %0, %cst [0, 2] : vector<2x4x16xf32> to vector<4xf32>
    %2 = vector.shape_cast %1 : vector<4xf32> to vector<1x4x1xf32>
    %3 = arith.mulf %0, %0 : vector<2x4x16xf32>
    %cst_2 = arith.constant dense<0.000000e+00> : vector<4xf32>
    %4 = vector.multi_reduction <add>, %3, %cst_2 [0, 2] : vector<2x4x16xf32> to vector<4xf32>
    %5 = vector.shape_cast %4 : vector<4xf32> to vector<1x4x1xf32>
    %cst_3 = arith.constant 3.125000e-02 : f32
    %6 = vector.broadcast %cst_3 : f32 to vector<1x4x1xf32>
    %7 = arith.mulf %2, %6 : vector<1x4x1xf32>
    %cst_4 = arith.constant 3.125000e-02 : f32
    %8 = vector.broadcast %cst_4 : f32 to vector<1x4x1xf32>
    %9 = arith.mulf %5, %8 : vector<1x4x1xf32>
    %10 = arith.mulf %7, %7 : vector<1x4x1xf32>
    %11 = arith.subf %9, %10 : vector<1x4x1xf32>
    %cst_5 = arith.constant 0.000000e+00 : f32
    %12 = vector.broadcast %cst_5 : f32 to vector<1x4x1xf32>
    %13 = arith.maximumf %11, %12 : vector<1x4x1xf32>
    %14 = math.rsqrt %13 : vector<1x4x1xf32>
    %15 = vector.broadcast %7 : vector<1x4x1xf32> to vector<2x4x16xf32>
    %16 = arith.subf %0, %15 : vector<2x4x16xf32>
    %17 = vector.broadcast %14 : vector<1x4x1xf32> to vector<2x4x16xf32>
    %18 = arith.mulf %16, %17 : vector<2x4x16xf32>
    %c0_6 = arith.constant 0 : index
    %c0_7 = arith.constant 0 : index
    %c0_8 = arith.constant 0 : index
    %19 = vector.load %arg2[%c0_6, %c0_7, %c0_8] : memref<2x4x16xf32, #tpu.memory_space<vmem>>, vector<2x4x16xf32>
    tpu.vector_store %arg2[%c0_6, %c0_7, %c0_8], %18 {strides = array<i32>} : memref<2x4x16xf32, #tpu.memory_space<vmem>>, vector<2x4x16xf32>,
    return
  }
  func.func @transform_0(%arg0: i32) -> (i32, i32, i32) {
    %c0_i32 = arith.constant 0 : i32
    %c0_i32_0 = arith.constant 0 : i32
    %c0_i32_1 = arith.constant 0 : i32
    return %c0_i32, %arg0, %c0_i32_0 : i32, i32, i32
  }
  func.func @transform_1(%arg0: i32) -> (i32, i32, i32) {
    %c0_i32 = arith.constant 0 : i32
    %c0_i32_0 = arith.constant 0 : i32
    %c0_i32_1 = arith.constant 0 : i32
    return %c0_i32, %arg0, %c0_i32_0 : i32, i32, i32
  }
}

</mosaic_0001>

<llo_original>
// kernel: tpu_custom_call.1
$region0: #{tpu_custom_call.1}
  #allocation0 [shape = 'u32[]', space=smem, size = 0x4, offset = 0x4, fixed_abs, tag = 'smem constant byte address 0x4 - core index']
  #allocation1 [shape = 'u32[72,128]{1,0:T(1,128)}', space=vmem, size = 0x9000, scoped, tag = 'internal scratch']
  %s0 = inlined_call_operand.hbm [shape: f32[2,4,16], index: 0, kind: input, shape index: {}]
  %s1 = inlined_call_operand.hbm [shape: f32[2,4,16], index: 1, kind: output, shape index: {}]
  %s2 = sld [smem:[#allocation0]]
  $region18: #{tpu_custom_call.1} parent=0
    _
  %s4 = ssub.s32 1, %s2
  %s5 = scalar_select 0, %s4, %s2
  $region1: #{tpu_custom_call.1} parent=0
    #allocation2 [shape = 'u8[4096]{0}', space=vmem, size = 0x1000, scoped, tag = 'input window, operand 0, single buffered']
    #allocation3 [shape = 's32[1]{0}', space=sflag, size = 0x4, scoped, tag = 'scoped memory for tpu_custom_call.1']
    #allocation4 [shape = 's32[1]{0}', space=sflag, size = 0x4, scoped, tag = 'scoped memory for tpu_custom_call.1']
    #allocation5 [shape = 'u8[4096]{0}', space=vmem, size = 0x1000, scoped, tag = 'output window, operand 0, single buffered']
    %6 = vsyncpa [#allocation3], 0
    %7 = vsyncpa [#allocation4], 0
    // Predicated region
    $region2: #{tpu_custom_call.1} parent=1 // pred_check
      _
    $region3: #{tpu_custom_call.1} parent=1 // pred_check_branch
      %9 = sbr.rel (0) target = $region5
    $region4: #{tpu_custom_call.1} parent=1 // pred_region
      %11 = vsyncadd [#allocation3], 0
      %s12 = sshll.u32 %s0, 4
      %s13 = int_to_ptr.hbm [resolvable:$true] %s12
      %s14 = sshll.u32 [#allocation2], 4
      %s15 = int_to_ptr.vmem [resolvable:$true] %s14
      %20 = dma.hbm_to_vmem [thread:$0]  %s13, 128, %s15, [#allocation3], 64, 64, 4
    $region5: #{tpu_custom_call.1} parent=1 // pred_fallthru
      _
    // Predicated region
    $region6: #{tpu_custom_call.1} parent=1 // pred_check
      _
    $region7: #{tpu_custom_call.1} parent=1 // pred_check_branch
      %22 = sbr.rel (0) target = $region9
    $region8: #{tpu_custom_call.1} parent=1 // pred_region
      %24 = dma.done [#allocation3], 128
    $region9: #{tpu_custom_call.1} parent=1 // pred_fallthru
      _
    %v25 = vld [vmem:[#allocation2] sm:$0xf]
    %v26 = vld [vmem:[#allocation2 + $0x4] sm:$0xf]
    %vm27 = vcmask 125952
    %v28 = vsel %vm27, %v25, 0.0
    %v29 = vsel %vm27, %v26, 0.0
    %v30 = vadd.f32 %v28, %v29
    %31 = vadd.xlane.f32.xlu0 %v30
    %v32 = vpop.xlane.xlu0 %31
    %v33 = vmul.f32 %v25, %v25
    %v34 = vmul.f32 %v26, %v26
    %v35 = vsel %vm27, %v33, 0.0
    %v36 = vsel %vm27, %v34, 0.0
    %v37 = vadd.f32 %v35, %v36
    %38 = vadd.xlane.f32.xlu0 %v37
    %v39 = vpop.xlane.xlu0 %38
    %v40 = vmul.f32 %v32, 0.03125
    %v41 = vmul.f32 %v39, 0.03125
    %v42 = vmul.f32 %v40, %v40
    %v43 = vsub.f32 %v41, %v42
    %v44 = vmax.f32 %v43, 0.0
    %v45 = vrsqrt.pop %v44
    %v46 = vmul.f32 %v45, %v44
    %v47 = vmul.f32 %v46, %v45
    %v48 = vmul.f32 0.5, %v47
    %v49 = vsub.f32 1.5, %v48
    %v50 = vmul.f32 %v45, %v49
    %vm51 = vweird.f32 %v44
    %vm52 = vweird.f32 %v45
    %vm53 = vmor %vm51, %vm52
    %v54 = vsel %vm53, %v45, %v50
    %v55 = vsub.f32 %v25, %v40
    %v56 = vsub.f32 %v26, %v40
    %v57 = vmul.f32 %v55, %v54
    %v58 = vmul.f32 %v56, %v54
    %59 = vst.msk [vmem:[#allocation5] sm:$0xf] %vm27, %v57
    %60 = vst.msk [vmem:[#allocation5 + $0x4] sm:$0xf] %vm27, %v58
    // Predicated region
    $region10: #{tpu_custom_call.1} parent=1 // pred_check
      _
    $region11: #{tpu_custom_call.1} parent=1 // pred_check_branch
      %62 = sbr.rel (0) target = $region13
    $region12: #{tpu_custom_call.1} parent=1 // pred_region
      %64 = vsyncadd [#allocation4], 0
      %s65 = sshll.u32 [#allocation5], 4
      %s66 = int_to_ptr.vmem [resolvable:$true] %s65
      %s67 = sshll.u32 %s1, 4
      %s68 = int_to_ptr.hbm [resolvable:$true] %s67
      %73 = dma.vmem_to_hbm [thread:$0]  %s66, 128, %s68, [#allocation4], 64, 64, 4
    $region13: #{tpu_custom_call.1} parent=1 // pred_fallthru
      _
    // Predicated region
    $region14: #{tpu_custom_call.1} parent=1 // pred_check
      _
    $region15: #{tpu_custom_call.1} parent=1 // pred_check_branch
      %75 = sbr.rel (0) target = $region17
    $region16: #{tpu_custom_call.1} parent=1 // pred_region
      %77 = dma.done [#allocation4], 128
    $region17: #{tpu_custom_call.1} parent=1 // pred_fallthru
      _
    %78 = vsyncpa [#allocation3], 1
    %79 = vsyncpa [#allocation4], 1

</llo_original>
